<compile_context>
chip_gen: v5e
topology: v5e:2x2
jax: 0.10.0
libtpu: 0.0.40
codegen_flags: <defaults>
</compile_context>

<pallas_src>
import numpy as np
import jax
import jax.numpy as jnp
from jax import lax
from jax.experimental import pallas as pl
from jax.experimental.pallas import tpu as pltpu

L_IN = 17  # 5 valid convs with k=3: 17 - 10 = 7, matching x5.view(-1, 7*8)

CONV_CFG = [  # (Cin, Cout, K)
    (1, 4, 3), (4, 8, 3), (8, 8, 3), (8, 8, 3), (8, 8, 3),
]
FC_CFG = [  # (in, out) for the two heads, PyTorch Linear convention (out, in)
    (56, 64), (64, 32), (32, 2),   # head 1
    (56, 64), (64, 32), (32, 1),   # head 2
]

N_OUT = 3  # merged output: [head1 (2 lanes) | head2 (1 lane)]


# ----------------------------------------------------------------------------
# Pallas kernel: whole forward pass = 3 matmuls on a fused/concat weight set
# ----------------------------------------------------------------------------
def base_net_kernel(x_ref, a1_ref, c1_ref, a2_ref, c2_ref, a3_ref, c3_ref,
                    out_ref):
    x = x_ref[...]                                                     # (TB, 17)
    h = jnp.maximum(
        jnp.dot(x, a1_ref[...], preferred_element_type=jnp.float32) + c1_ref[...],
        0.0)                                                           # (TB, 128)
    h = jnp.maximum(
        jnp.dot(h, a2_ref[...], preferred_element_type=jnp.float32) + c2_ref[...],
        0.0)                                                           # (TB, 64)
    out_ref[...] = (
        jnp.dot(h, a3_ref[...], preferred_element_type=jnp.float32) + c3_ref[...]
    )                                                                  # (TB, 3)


def _round_up(n, m):
    return ((n + m - 1) // m) * m


def base_net_pallas(x2d, fused, *, tb=512):
    """x2d: (B, 17) f32 (PyTorch NCL input with the singleton channel squeezed).

    fused: (A1, c1, A2, c2, A3, c3) from build_fused_args().
    Returns (out1 (B,2), out2 (B,1)) matching the PyTorch module."""
    a1, c1, a2, c2, a3, c3 = fused
    B = x2d.shape[0]

    tb = min(tb, _round_up(B, 8))          # small batches: single 8-multiple tile
    b_pad = _round_up(B, tb)
    if b_pad != B:
        x2d = jnp.pad(x2d, ((0, b_pad - B), (0, 0)))
    grid = (b_pad // tb,)

    def const_spec(arr):  # weights stay VMEM-resident across batch tiles
        return pl.BlockSpec(arr.shape, lambda i: (0, 0))

    flops = 2 * b_pad * (L_IN * 128 + 128 * 64 + 64 * N_OUT)
    weight_bytes = 4 * sum(int(np.prod(a.shape)) for a in fused)
    bytes_accessed = 4 * b_pad * (L_IN + N_OUT) + weight_bytes

    out = pl.pallas_call(
        base_net_kernel,
        out_shape=jax.ShapeDtypeStruct((b_pad, N_OUT), jnp.float32),
        grid_spec=pltpu.PrefetchScalarGridSpec(
            num_scalar_prefetch=0,
            grid=grid,
            in_specs=[
                pl.BlockSpec((tb, L_IN), lambda i: (i, 0)),
                const_spec(a1), const_spec(c1),
                const_spec(a2), const_spec(c2),
                const_spec(a3), const_spec(c3),
            ],
            out_specs=pl.BlockSpec((tb, N_OUT), lambda i: (i, 0)),
        ),
        compiler_params=pltpu.CompilerParams(
            dimension_semantics=("parallel",),   # v7x: shard batch tiles over 2 TCs
        ),
        cost_estimate=pl.CostEstimate(
            flops=flops, transcendentals=0, bytes_accessed=bytes_accessed),
    )(x2d, a1, c1, a2, c2, a3, c3)

    return out[:B, :2], out[:B, 2:3]


# ----------------------------------------------------------------------------
# Parameter setup (deterministic) + glue: fold convs + fc1, concat the heads
# ----------------------------------------------------------------------------
def init_params(key):
    params = {}
    keys = jax.random.split(key, 22)
    ki = 0

    def nrm(shape):
        nonlocal ki
        v = 0.1 * jax.random.normal(keys[ki], shape, dtype=jnp.float32)
        ki += 1
        return v

    for idx, (cin, cout, k) in enumerate(CONV_CFG, start=1):
        params[f"conv{idx}.weight"] = nrm((cout, cin, k))
        params[f"conv{idx}.bias"] = nrm((cout,))
    names = ["fc1_1", "fc2_1", "fc3_1", "fc1_2", "fc2_2", "fc3_2"]
    for name, (fin, fout) in zip(names, FC_CFG):
        params[f"{name}.weight"] = nrm((fout, fin))   # PyTorch (out, in)
        params[f"{name}.bias"] = nrm((fout,))
    return params


def conv_to_toeplitz(w, b, l_in):
    """Expand a valid-padding stride-1 Conv1d to a (Cin*Lin, Cout*Lout) matrix
    so that  out_flat = x_flat @ W + Bvec  (channel-major flattening)."""
    w = np.asarray(w, np.float32)
    b = np.asarray(b, np.float32)
    cout, cin, k = w.shape
    l_out = l_in - k + 1
    W = np.zeros((cin * l_in, cout * l_out), np.float32)
    for o in range(cout):
        for i in range(cin):
            for kk in range(k):
                for l in range(l_out):
                    W[i * l_in + l + kk, o * l_out + l] = w[o, i, kk]
    Bvec = np.repeat(b, l_out)[None, :]  # (1, Cout*Lout)
    return W, Bvec, l_out


def build_fused_args(params):
    """Fold conv1..conv5 into one (17,56) affine map, then fuse it into the
    concatenated fc1 layers of both heads and block-diagonalize fc2/fc3."""
    # 1) conv stack -> single affine map (no nonlinearity between convs)
    l = L_IN
    Wc = np.eye(L_IN, dtype=np.float32)           # (17, 17) running product
    bc = np.zeros((1, L_IN), np.float32)          # running bias row
    for idx in range(1, 6):
        W, Bv, l = conv_to_toeplitz(params[f"conv{idx}.weight"],
                                    params[f"conv{idx}.bias"], l)
        Wc = Wc @ W                               # (17, Cout*Lout)
        bc = bc @ W + Bv
    # Wc: (17, 56), bc: (1, 56) — channel-major, identical to x5.view(-1, 56)

    def t(name):   # PyTorch Linear weight (out,in) -> matmul layout (in,out)
        return np.asarray(params[f"{name}.weight"], np.float32).T

    def bias(name):
        return np.asarray(params[f"{name}.bias"], np.float32)

    # 2) fc1 of both heads, concatenated on the output axis, folded with the convs
    F1 = np.concatenate([t("fc1_1"), t("fc1_2")], axis=1)          # (56, 128)
    b1 = np.concatenate([bias("fc1_1"), bias("fc1_2")])[None, :]   # (1, 128)
    A1 = (Wc @ F1).astype(np.float32)                              # (17, 128)
    c1 = (bc @ F1 + b1).astype(np.float32)                         # (1, 128)

    # 3) fc2 as block-diagonal (128, 64)
    A2 = np.zeros((128, 64), np.float32)
    A2[:64, :32] = t("fc2_1")
    A2[64:, 32:] = t("fc2_2")
    c2 = np.concatenate([bias("fc2_1"), bias("fc2_2")])[None, :]   # (1, 64)

    # 4) fc3 as block-diagonal (64, 3): lanes [0:2] = head1, lane [2] = head2
    A3 = np.zeros((64, N_OUT), np.float32)
    A3[:32, :2] = t("fc3_1")
    A3[32:, 2:] = t("fc3_2")
    c3 = np.concatenate([bias("fc3_1"), bias("fc3_2")])[None, :]   # (1, 3)

    return tuple(jnp.asarray(a) for a in (A1, c1, A2, c2, A3, c3))


# ----------------------------------------------------------------------------
# Pure-JAX reference (mirrors the PyTorch forward exactly) for verification
# ----------------------------------------------------------------------------
def reference_forward(x_ncl, params):
    h = x_ncl
    for idx in range(1, 6):
        w = params[f"conv{idx}.weight"]
        b = params[f"conv{idx}.bias"]
        h = lax.conv_general_dilated(h, w, window_strides=(1,), padding="VALID",
                                     dimension_numbers=("NCH", "OIH", "NCH"))
        h = h + b[None, :, None]
    x5 = h.reshape(h.shape[0], -1)  # (B, 56) channel-major == .view(-1, 7*8)

    def head(pfx):
        a = jax.nn.relu(x5 @ params[f"fc1_{pfx}.weight"].T + params[f"fc1_{pfx}.bias"])
        a = jax.nn.relu(a @ params[f"fc2_{pfx}.weight"].T + params[f"fc2_{pfx}.bias"])
        return a @ params[f"fc3_{pfx}.weight"].T + params[f"fc3_{pfx}.bias"]

    return head("1"), head("2")


# ----------------------------------------------------------------------------
if __name__ == "__main__":
    key = jax.random.PRNGKey(0)
    pkey, xkey1, xkey2 = jax.random.split(key, 3)

    params = init_params(pkey)
    fused = build_fused_args(params)

    # --- small-batch check (B=2, single 8-row tile) ------------------------
    B = 2
    x_ncl = jax.random.normal(xkey1, (B, 1, L_IN), dtype=jnp.float32)
    x2d = x_ncl.reshape(B, L_IN)

    out1, out2 = jax.block_until_ready(base_net_pallas(x2d, fused))
    ref1, ref2 = reference_forward(x_ncl, params)
    assert out1.shape == (B, 2) and out2.shape == (B, 1)
    np.testing.assert_allclose(np.asarray(out1), np.asarray(ref1), rtol=1e-4, atol=1e-4)
    np.testing.assert_allclose(np.asarray(out2), np.asarray(ref2), rtol=1e-4, atol=1e-4)

    # --- multi-tile grid check (B=200 not divisible by TB=64, tail padded) -
    B2 = 200
    x_ncl2 = jax.random.normal(xkey2, (B2, 1, L_IN), dtype=jnp.float32)
    o1, o2 = jax.block_until_ready(
        base_net_pallas(x_ncl2.reshape(B2, L_IN), fused, tb=64))
    r1, r2 = reference_forward(x_ncl2, params)
    np.testing.assert_allclose(np.asarray(o1), np.asarray(r1), rtol=1e-4, atol=1e-4)
    np.testing.assert_allclose(np.asarray(o2), np.asarray(r2), rtol=1e-4, atol=1e-4)

    print("KERNEL_OK")
</pallas_src>

<mosaic_0001>
module attributes {stable_mosaic.version = 11 : i64} {
  func.func @base_net_kernel(%arg0: i32, %arg1: memref<8x17xf32, #tpu.memory_space<vmem>>, %arg2: memref<17x128xf32, #tpu.memory_space<vmem>>, %arg3: memref<1x128xf32, #tpu.memory_space<vmem>>, %arg4: memref<128x64xf32, #tpu.memory_space<vmem>>, %arg5: memref<1x64xf32, #tpu.memory_space<vmem>>, %arg6: memref<64x3xf32, #tpu.memory_space<vmem>>, %arg7: memref<1x3xf32, #tpu.memory_space<vmem>>, %arg8: memref<8x3xf32, #tpu.memory_space<vmem>>) attributes {dimension_semantics = [#tpu.dimension_semantics<parallel>], iteration_bounds = array<i64: 1>, scalar_prefetch = 0 : i64, scratch_operands = 0 : i64, tpu.core_type = #tpu.core_type<tc>, window_params = [{transform_indices = @transform_0, window_bounds = array<i64: 8, 17>}, {pipeline_mode = #tpu.pipeline_mode<synchronous>, transform_indices = @transform_1, window_bounds = array<i64: 17, 128>}, {pipeline_mode = #tpu.pipeline_mode<synchronous>, transform_indices = @transform_2, window_bounds = array<i64: 1, 128>}, {pipeline_mode = #tpu.pipeline_mode<synchronous>, transform_indices = @transform_3, window_bounds = array<i64: 128, 64>}, {pipeline_mode = #tpu.pipeline_mode<synchronous>, transform_indices = @transform_4, window_bounds = array<i64: 1, 64>}, {pipeline_mode = #tpu.pipeline_mode<synchronous>, transform_indices = @transform_5, window_bounds = array<i64: 64, 3>}, {pipeline_mode = #tpu.pipeline_mode<synchronous>, transform_indices = @transform_6, window_bounds = array<i64: 1, 3>}, {transform_indices = @transform_7, window_bounds = array<i64: 8, 3>}]} {
    %c0 = arith.constant 0 : index
    %c0_0 = arith.constant 0 : index
    %0 = vector.load %arg1[%c0, %c0_0] : memref<8x17xf32, #tpu.memory_space<vmem>>, vector<8x17xf32>
    %c0_1 = arith.constant 0 : index
    %c0_2 = arith.constant 0 : index
    %1 = vector.load %arg2[%c0_1, %c0_2] : memref<17x128xf32, #tpu.memory_space<vmem>>, vector<17x128xf32>
    %cst = arith.constant dense<0.000000e+00> : vector<8x128xf32>
    %2 = tpu.matmul %0, %1, %cst {dimension_numbers = #tpu.dot_dimension_numbers<[1], [0], [0], [1], [0, 0, 1, 1], [], []>} : vector<8x17xf32>, vector<17x128xf32>, vector<8x128xf32> -> vector<8x128xf32>
    %c0_3 = arith.constant 0 : index
    %c0_4 = arith.constant 0 : index
    %3 = vector.load %arg3[%c0_3, %c0_4] : memref<1x128xf32, #tpu.memory_space<vmem>>, vector<1x128xf32>
    %4 = vector.broadcast %3 : vector<1x128xf32> to vector<8x128xf32>
    %5 = arith.addf %2, %4 : vector<8x128xf32>
    %cst_5 = arith.constant 0.000000e+00 : f32
    %6 = vector.broadcast %cst_5 : f32 to vector<8x128xf32>
    %7 = arith.maximumf %5, %6 : vector<8x128xf32>
    %c0_6 = arith.constant 0 : index
    %c0_7 = arith.constant 0 : index
    %8 = vector.load %arg4[%c0_6, %c0_7] : memref<128x64xf32, #tpu.memory_space<vmem>>, vector<128x64xf32>
    %cst_8 = arith.constant dense<0.000000e+00> : vector<8x64xf32>
    %9 = tpu.matmul %7, %8, %cst_8 {dimension_numbers = #tpu.dot_dimension_numbers<[1], [0], [0], [1], [0, 0, 1, 1], [], []>} : vector<8x128xf32>, vector<128x64xf32>, vector<8x64xf32> -> vector<8x64xf32>
    %c0_9 = arith.constant 0 : index
    %c0_10 = arith.constant 0 : index
    %10 = vector.load %arg5[%c0_9, %c0_10] : memref<1x64xf32, #tpu.memory_space<vmem>>, vector<1x64xf32>
    %11 = vector.broadcast %10 : vector<1x64xf32> to vector<8x64xf32>
    %12 = arith.addf %9, %11 : vector<8x64xf32>
    %cst_11 = arith.constant 0.000000e+00 : f32
    %13 = vector.broadcast %cst_11 : f32 to vector<8x64xf32>
    %14 = arith.maximumf %12, %13 : vector<8x64xf32>
    %c0_12 = arith.constant 0 : index
    %c0_13 = arith.constant 0 : index
    %15 = vector.load %arg6[%c0_12, %c0_13] : memref<64x3xf32, #tpu.memory_space<vmem>>, vector<64x3xf32>
    %cst_14 = arith.constant dense<0.000000e+00> : vector<8x3xf32>
    %16 = tpu.matmul %14, %15, %cst_14 {dimension_numbers = #tpu.dot_dimension_numbers<[1], [0], [0], [1], [0, 0, 1, 1], [], []>} : vector<8x64xf32>, vector<64x3xf32>, vector<8x3xf32> -> vector<8x3xf32>
    %c0_15 = arith.constant 0 : index
    %c0_16 = arith.constant 0 : index
    %17 = vector.load %arg7[%c0_15, %c0_16] : memref<1x3xf32, #tpu.memory_space<vmem>>, vector<1x3xf32>
    %18 = vector.broadcast %17 : vector<1x3xf32> to vector<8x3xf32>
    %19 = arith.addf %16, %18 : vector<8x3xf32>
    %c0_17 = arith.constant 0 : index
    %c0_18 = arith.constant 0 : index
    %20 = vector.load %arg8[%c0_17, %c0_18] : memref<8x3xf32, #tpu.memory_space<vmem>>, vector<8x3xf32>
    tpu.vector_store %arg8[%c0_17, %c0_18], %19 {strides = array<i32>} : memref<8x3xf32, #tpu.memory_space<vmem>>, vector<8x3xf32>,
    return
  }
  func.func @transform_0(%arg0: i32) -> (i32, i32) {
    %c0_i32 = arith.constant 0 : i32
    %c0_i32_0 = arith.constant 0 : i32
    return %arg0, %c0_i32 : i32, i32
  }
  func.func @transform_1(%arg0: i32) -> (i32, i32) {
    %c0_i32 = arith.constant 0 : i32
    %c0_i32_0 = arith.constant 0 : i32
    %c0_i32_1 = arith.constant 0 : i32
    return %c0_i32, %c0_i32_0 : i32, i32
  }
  func.func @transform_2(%arg0: i32) -> (i32, i32) {
    %c0_i32 = arith.constant 0 : i32
    %c0_i32_0 = arith.constant 0 : i32
    %c0_i32_1 = arith.constant 0 : i32
    return %c0_i32, %c0_i32_0 : i32, i32
  }
  func.func @transform_3(%arg0: i32) -> (i32, i32) {
    %c0_i32 = arith.constant 0 : i32
    %c0_i32_0 = arith.constant 0 : i32
    %c0_i32_1 = arith.constant 0 : i32
    return %c0_i32, %c0_i32_0 : i32, i32
  }
  func.func @transform_4(%arg0: i32) -> (i32, i32) {
    %c0_i32 = arith.constant 0 : i32
    %c0_i32_0 = arith.constant 0 : i32
    %c0_i32_1 = arith.constant 0 : i32
    return %c0_i32, %c0_i32_0 : i32, i32
  }
  func.func @transform_5(%arg0: i32) -> (i32, i32) {
    %c0_i32 = arith.constant 0 : i32
    %c0_i32_0 = arith.constant 0 : i32
    %c0_i32_1 = arith.constant 0 : i32
    return %c0_i32, %c0_i32_0 : i32, i32
  }
  func.func @transform_6(%arg0: i32) -> (i32, i32) {
    %c0_i32 = arith.constant 0 : i32
    %c0_i32_0 = arith.constant 0 : i32
    %c0_i32_1 = arith.constant 0 : i32
    return %c0_i32, %c0_i32_0 : i32, i32
  }
  func.func @transform_7(%arg0: i32) -> (i32, i32) {
    %c0_i32 = arith.constant 0 : i32
    %c0_i32_0 = arith.constant 0 : i32
    return %arg0, %c0_i32 : i32, i32
  }
}

</mosaic_0001>

<llo_original>
// kernel: tpu_custom_call.1
$region0: #{tpu_custom_call.1}
  #allocation0 [shape = 'u32[]', space=smem, size = 0x4, offset = 0x4, fixed_abs, tag = 'smem constant byte address 0x4 - core index']
  #allocation1 [shape = 'u32[72,128]{1,0:T(1,128)}', space=vmem, size = 0x9000, scoped, tag = 'internal scratch']
  %s0 = inlined_call_operand.vmem [shape: f32[8,17], index: 0, kind: input, shape index: {}]
  %s1 = inlined_call_operand.vmem [shape: f32[17,128], index: 1, kind: input, shape index: {}]
  %s2 = inlined_call_operand.vmem [shape: f32[1,128], index: 2, kind: input, shape index: {}]
  %s3 = inlined_call_operand.vmem [shape: f32[128,64], index: 3, kind: input, shape index: {}]
  %s4 = inlined_call_operand.vmem [shape: f32[1,64], index: 4, kind: input, shape index: {}]
  %s5 = inlined_call_operand.vmem [shape: f32[64,3], index: 5, kind: input, shape index: {}]
  %s6 = inlined_call_operand.vmem [shape: f32[1,3], index: 6, kind: input, shape index: {}]
  %s7 = inlined_call_operand.vmem [shape: f32[8,3], index: 7, kind: output, shape index: {}]
  %s8 = sld [smem:[#allocation0]]
  $region38: #{tpu_custom_call.1} parent=0
    _
  %s10 = ssub.s32 1, %s8
  %s11 = scalar_select 0, %s10, %s8
  // Predicated region
  $region2: #{tpu_custom_call.1} parent=0 // pred_check
    _
  $region3: #{tpu_custom_call.1} parent=0 // pred_check_branch
    %13 = sbr.rel (0) target = $region5
  $region4: #{tpu_custom_call.1} parent=0 // pred_region
    _
  $region5: #{tpu_custom_call.1} parent=0 // pred_fallthru
    _
  // Predicated region
  $region6: #{tpu_custom_call.1} parent=0 // pred_check
    _
  $region7: #{tpu_custom_call.1} parent=0 // pred_check_branch
    %15 = sbr.rel (0) target = $region9
  $region8: #{tpu_custom_call.1} parent=0 // pred_region
    _
  $region9: #{tpu_custom_call.1} parent=0 // pred_fallthru
    _
  // Predicated region
  $region10: #{tpu_custom_call.1} parent=0 // pred_check
    _
  $region11: #{tpu_custom_call.1} parent=0 // pred_check_branch
    %17 = sbr.rel (0) target = $region13
  $region12: #{tpu_custom_call.1} parent=0 // pred_region
    _
  $region13: #{tpu_custom_call.1} parent=0 // pred_fallthru
    _
  // Predicated region
  $region14: #{tpu_custom_call.1} parent=0 // pred_check
    _
  $region15: #{tpu_custom_call.1} parent=0 // pred_check_branch
    %19 = sbr.rel (0) target = $region17
  $region16: #{tpu_custom_call.1} parent=0 // pred_region
    _
  $region17: #{tpu_custom_call.1} parent=0 // pred_fallthru
    _
  // Predicated region
  $region18: #{tpu_custom_call.1} parent=0 // pred_check
    _
  $region19: #{tpu_custom_call.1} parent=0 // pred_check_branch
    %21 = sbr.rel (0) target = $region21
  $region20: #{tpu_custom_call.1} parent=0 // pred_region
    _
  $region21: #{tpu_custom_call.1} parent=0 // pred_fallthru
    _
  // Predicated region
  $region22: #{tpu_custom_call.1} parent=0 // pred_check
    _
  $region23: #{tpu_custom_call.1} parent=0 // pred_check_branch
    %23 = sbr.rel (0) target = $region25
  $region24: #{tpu_custom_call.1} parent=0 // pred_region
    _
  $region25: #{tpu_custom_call.1} parent=0 // pred_fallthru
    _
  // Predicated region
  $region26: #{tpu_custom_call.1} parent=0 // pred_check
    _
  $region27: #{tpu_custom_call.1} parent=0 // pred_check_branch
    %25 = sbr.rel (0) target = $region29
  $region28: #{tpu_custom_call.1} parent=0 // pred_region
    _
  $region29: #{tpu_custom_call.1} parent=0 // pred_fallthru
    _
  %v26 = vld [vmem:[%s0] sm:$0xff]
  %v27 = vld [vmem:[%s1] sm:$0xff]
  %v28 = vld [vmem:[%s1 + $0x8] sm:$0xff]
  %v29 = vld [vmem:[%s1 + $0x10] sm:$0x1]
  %v30 = vld [vmem:[%s2] sm:$0x1]
  %v32 = vperm.slane %v30, 0
  %vm34 = vcmask 138240
  %v36 = vsel %vm34, %v26, 0
  %vm38 = vcmask 1040384
  %v40 = vsel %vm38, %v29, 0
  %42 = vmatpush.msra.mxu0 0.0
  %43 = vmatpush.msra.mxu0 0.0
  %44 = vmatpush.msra.mxu0 0.0
  %45 = vmatpush.msra.mxu0 0.0
  %46 = vmatpush.msra.mxu0 0.0
  %47 = vmatpush.msra.mxu0 0.0
  %48 = vmatpush.msra.mxu0 0.0
  %49 = vmatpush.msra.mxu0 0.0
  %50 = vmatpush.msra.mxu0 0.0
  %51 = vmatpush.msra.mxu0 0.0
  %52 = vmatpush.msra.mxu0 0.0
  %53 = vmatpush.msra.mxu0 0.0
  %54 = vmatpush.msra.mxu0 0.0
  %55 = vmatpush.msra.mxu0 %v40
  %56 = vmatpush.msra.mxu0 %v28
  %57 = vmatpush.msra.mxu0 %v27
  %58 = vmatmul.f32.gmra.mxu0 %v36
  %v59 = vpop.f32.mrf.mxu0
  %v60 = vadd.f32 %v32, %v59
  %61 = vdwg.mxu0
  %v62 = vmax.f32 %v60, 0.0
  %v63 = vld [vmem:[%s3] sm:$0xff]
  %v64 = vld [vmem:[%s3 + $0x8] sm:$0xff]
  %v65 = vld [vmem:[%s3 + $0x10] sm:$0xff]
  %v66 = vld [vmem:[%s3 + $0x18] sm:$0xff]
  %v67 = vld [vmem:[%s3 + $0x20] sm:$0xff]
  %v68 = vld [vmem:[%s3 + $0x28] sm:$0xff]
  %v69 = vld [vmem:[%s3 + $0x30] sm:$0xff]
  %v70 = vld [vmem:[%s3 + $0x38] sm:$0xff]
  %v71 = vld [vmem:[%s3 + $0x40] sm:$0xff]
  %v72 = vld [vmem:[%s3 + $0x48] sm:$0xff]
  %v73 = vld [vmem:[%s3 + $0x50] sm:$0xff]
  %v74 = vld [vmem:[%s3 + $0x58] sm:$0xff]
  %v75 = vld [vmem:[%s3 + $0x60] sm:$0xff]
  %v76 = vld [vmem:[%s3 + $0x68] sm:$0xff]
  %v77 = vld [vmem:[%s3 + $0x70] sm:$0xff]
  %v78 = vld [vmem:[%s3 + $0x78] sm:$0xff]
  %v79 = vld [vmem:[%s4] sm:$0x1]
  %v81 = vperm.slane %v79, 0
  %83 = vmatpush.msra.mxu0 %v78
  %84 = vmatpush.msra.mxu0 %v77
  %85 = vmatpush.msra.mxu0 %v76
  %86 = vmatpush.msra.mxu0 %v75
  %87 = vmatpush.msra.mxu0 %v74
  %88 = vmatpush.msra.mxu0 %v73
  %89 = vmatpush.msra.mxu0 %v72
  %90 = vmatpush.msra.mxu0 %v71
  %91 = vmatpush.msra.mxu0 %v70
  %92 = vmatpush.msra.mxu0 %v69
  %93 = vmatpush.msra.mxu0 %v68
  %94 = vmatpush.msra.mxu0 %v67
  %95 = vmatpush.msra.mxu0 %v66
  %96 = vmatpush.msra.mxu0 %v65
  %97 = vmatpush.msra.mxu0 %v64
  %98 = vmatpush.msra.mxu0 %v63
  %99 = vmatmul.f32.gmra.mxu0 %v62
  %v100 = vpop.f32.mrf.mxu0
  %v101 = vadd.f32 %v81, %v100
  %102 = vdwg.mxu0
  %v103 = vmax.f32 %v101, 0.0
  %v104 = vld [vmem:[%s5] sm:$0xff]
  %v105 = vld [vmem:[%s5 + $0x8] sm:$0xff]
  %v106 = vld [vmem:[%s5 + $0x10] sm:$0xff]
  %v107 = vld [vmem:[%s5 + $0x18] sm:$0xff]
  %v108 = vld [vmem:[%s5 + $0x20] sm:$0xff]
  %v109 = vld [vmem:[%s5 + $0x28] sm:$0xff]
  %v110 = vld [vmem:[%s5 + $0x30] sm:$0xff]
  %v111 = vld [vmem:[%s5 + $0x38] sm:$0xff]
  %v112 = vld [vmem:[%s6] sm:$0x1]
  %v114 = vperm.slane %v112, 0
  %vm116 = vcmask 523264
  %v118 = vsel %vm116, %v103, 0
  %120 = vmatpush.msra.mxu0 0.0
  %121 = vmatpush.msra.mxu0 0.0
  %122 = vmatpush.msra.mxu0 0.0
  %123 = vmatpush.msra.mxu0 0.0
  %124 = vmatpush.msra.mxu0 0.0
  %125 = vmatpush.msra.mxu0 0.0
  %126 = vmatpush.msra.mxu0 0.0
  %127 = vmatpush.msra.mxu0 0.0
  %128 = vmatpush.msra.mxu0 %v111
  %129 = vmatpush.msra.mxu0 %v110
  %130 = vmatpush.msra.mxu0 %v109
  %131 = vmatpush.msra.mxu0 %v108
  %132 = vmatpush.msra.mxu0 %v107
  %133 = vmatpush.msra.mxu0 %v106
  %134 = vmatpush.msra.mxu0 %v105
  %135 = vmatpush.msra.mxu0 %v104
  %136 = vmatmul.f32.gmra.mxu0 %v118
  %v137 = vpop.f32.mrf.mxu0
  %v138 = vadd.f32 %v114, %v137
  %139 = vdwg.mxu0
  %vm140 = vcmask 23552
  %141 = vst.msk [vmem:[%s7] sm:$0xff] %vm140, %v138
  // Predicated region
  $region30: #{tpu_custom_call.1} parent=0 // pred_check
    _
  $region31: #{tpu_custom_call.1} parent=0 // pred_check_branch
    %143 = sbr.rel (0) target = $region33
  $region32: #{tpu_custom_call.1} parent=0 // pred_region
    _
  $region33: #{tpu_custom_call.1} parent=0 // pred_fallthru
    _
  // Predicated region
  $region34: #{tpu_custom_call.1} parent=0 // pred_check
    _
  $region35: #{tpu_custom_call.1} parent=0 // pred_check_branch
    %145 = sbr.rel (0) target = $region37
  $region36: #{tpu_custom_call.1} parent=0 // pred_region
    _
  $region37: #{tpu_custom_call.1} parent=0 // pred_fallthru
    _

</llo_original>
